<compile_context>
chip_gen: v5e
topology: v5e:2x2
jax: 0.10.0
libtpu: 0.0.40
codegen_flags: <defaults>
</compile_context>

<pallas_src>
import jax
import jax.numpy as jnp
from jax.experimental import pallas as pl
from jax.experimental.pallas import tpu as pltpu

IN_FEATURES = 1000
OUT_FEATURES = 1
TM_MAX = 2048          # default rows per grid step (multiple of 8)
XLA_SMALL_BATCH = 512  # below this batch size, plain XLA beats a pallas_call


def _round_up(n, m):
    return ((n + m - 1) // m) * m


def _linear_kernel(x_ref, w_ref, b_ref, o_ref):
    """One batch tile of Linear(1000, 1).

    x_ref: (tm, 1000) VMEM  -- streamed, one block per grid step
    w_ref: (1, 1000)  VMEM  -- constant index_map -> stays VMEM-resident
    b_ref: (1, 1)     SMEM  -- scalar bias
    o_ref: (tm, 1)    VMEM
    """
    # N=1, so skip the MXU entirely: broadcast multiply on the VPU and a lane
    # reduction on the XLU; both hide completely under the x-tile DMA.
    prod = x_ref[...] * w_ref[...]                      # (tm, 1000)
    acc = jnp.sum(prod, axis=-1, keepdims=True)         # (tm, 1), f32
    o_ref[...] = acc + b_ref[0, 0]


def binary_classifier_forward(
    x,
    w,
    b,
    *,
    tm_max=TM_MAX,
    small_batch_xla_threshold=XLA_SMALL_BATCH,
    megacore=False,
):
    """Forward pass of Linear(1000, 1).

    x: (B, 1000) float32
    w: (1, 1000) float32  (PyTorch nn.Linear weight layout)
    b: (1,)      float32  (PyTorch nn.Linear bias)
    returns: (B, 1) float32  ==  x @ w.T + b
    """
    B = x.shape[0]
    x = x.astype(jnp.float32)
    w = jnp.asarray(w, jnp.float32).reshape(OUT_FEATURES, IN_FEATURES)
    b2 = jnp.asarray(b, jnp.float32).reshape(1, 1)

    # Tiny batches: the pallas_call fixed cost (grid setup + per-step overhead)
    # dominates, so just let XLA do it.
    if B < small_batch_xla_threshold:
        return x @ w.T + b2

    # Batch tile: multiple of 8 (sublane rule), capped near tm_max, never
    # (much) larger than B so a ragged last block stays cheap.
    tm = _round_up(min(max(tm_max, 8), max(B, 1)), 8)
    grid = (pl.cdiv(B, tm),)

    # Explicit VMEM budget: double-buffered x and out blocks plus the resident
    # weight row, with headroom for internal scratch.  Floor at 16 MiB (safe on
    # every generation; v7x physical VMEM per TC is 64 MiB).
    working_set = 2 * (
        tm * IN_FEATURES * 4 + tm * OUT_FEATURES * 4 + IN_FEATURES * 4
    )
    vmem_limit = max(working_set + (2 << 20), 16 << 20)

    dim_sem = (pltpu.CORE_PARALLEL,) if megacore else (pltpu.PARALLEL,)

    return pl.pallas_call(
        _linear_kernel,
        out_shape=jax.ShapeDtypeStruct((B, OUT_FEATURES), jnp.float32),
        grid_spec=pltpu.PrefetchScalarGridSpec(
            num_scalar_prefetch=0,
            grid=grid,
            in_specs=[
                # x: one (tm, 1000) block per step; full-K block, no padding.
                pl.BlockSpec((tm, IN_FEATURES), lambda i: (i, 0)),
                # weight row: same block every step -> VMEM-resident.
                pl.BlockSpec((OUT_FEATURES, IN_FEATURES), lambda i: (0, 0)),
                # bias: scalar in SMEM.
                pl.BlockSpec(memory_space=pltpu.MemorySpace.SMEM),
            ],
            out_specs=pl.BlockSpec((tm, OUT_FEATURES), lambda i: (i, 0)),
        ),
        compiler_params=pltpu.CompilerParams(
            dimension_semantics=dim_sem,
            vmem_limit_bytes=vmem_limit,
        ),
    )(x, w, b2)


def init_params(key):
    # Mirror PyTorch nn.Linear default init: U(-1/sqrt(fan_in), 1/sqrt(fan_in)).
    kw, kb = jax.random.split(key)
    bound = 1.0 / (IN_FEATURES ** 0.5)
    w = jax.random.uniform(
        kw, (OUT_FEATURES, IN_FEATURES), jnp.float32, -bound, bound
    )
    b = jax.random.uniform(kb, (OUT_FEATURES,), jnp.float32, -bound, bound)
    return w, b


if __name__ == "__main__":
    key = jax.random.PRNGKey(0)
    k_x1, k_x2, k_p = jax.random.split(key, 3)

    w, b = init_params(k_p)

    # Small batch, single tile; force the Pallas path (threshold=0).
    B1 = 8
    x1 = jax.random.normal(k_x1, (B1, IN_FEATURES), jnp.float32)
    out1 = jax.block_until_ready(
        binary_classifier_forward(x1, w, b, small_batch_xla_threshold=0)
    )
    ref1 = x1 @ w.T + b
    assert out1.shape == (B1, OUT_FEATURES)
    assert jnp.allclose(out1, ref1, atol=1e-4, rtol=1e-4)

    # Multi-tile with a ragged last block (40 = 2*16 + 8), Pallas path.
    B2 = 40
    x2 = jax.random.normal(k_x2, (B2, IN_FEATURES), jnp.float32)
    out2 = jax.block_until_ready(
        binary_classifier_forward(
            x2, w, b, tm_max=16, small_batch_xla_threshold=0
        )
    )
    ref2 = x2 @ w.T + b
    assert out2.shape == (B2, OUT_FEATURES)
    assert jnp.allclose(out2, ref2, atol=1e-4, rtol=1e-4)

    # Default small-batch short-circuit (plain XLA) still matches.
    out3 = jax.block_until_ready(binary_classifier_forward(x1, w, b))
    assert out3.shape == (B1, OUT_FEATURES)
    assert jnp.allclose(out3, ref1, atol=1e-4, rtol=1e-4)

    print("KERNEL_OK")
</pallas_src>

<mosaic_0001>
module attributes {stable_mosaic.version = 11 : i64} {
  func.func @_linear_kernel(%arg0: i32, %arg1: memref<8x1000xf32, #tpu.memory_space<vmem>>, %arg2: memref<1x1000xf32, #tpu.memory_space<vmem>>, %arg3: memref<1x1xf32, #tpu.memory_space<smem>>, %arg4: memref<8x1xf32, #tpu.memory_space<vmem>>) attributes {dimension_semantics = [#tpu.dimension_semantics<parallel>], iteration_bounds = array<i64: 1>, scalar_prefetch = 0 : i64, scratch_operands = 0 : i64, tpu.core_type = #tpu.core_type<tc>, window_params = [{transform_indices = @transform_0, window_bounds = array<i64: 8, 1000>}, {pipeline_mode = #tpu.pipeline_mode<synchronous>, transform_indices = @transform_1, window_bounds = array<i64: 1, 1000>}, {transform_indices = @transform_2, window_bounds = array<i64: 1, 1>}, {transform_indices = @transform_3, window_bounds = array<i64: 8, 1>}]} {
    %c0 = arith.constant 0 : index
    %c0_0 = arith.constant 0 : index
    %0 = vector.load %arg1[%c0, %c0_0] : memref<8x1000xf32, #tpu.memory_space<vmem>>, vector<8x1000xf32>
    %c0_1 = arith.constant 0 : index
    %c0_2 = arith.constant 0 : index
    %1 = vector.load %arg2[%c0_1, %c0_2] : memref<1x1000xf32, #tpu.memory_space<vmem>>, vector<1x1000xf32>
    %2 = vector.broadcast %1 : vector<1x1000xf32> to vector<8x1000xf32>
    %3 = arith.mulf %0, %2 : vector<8x1000xf32>
    %cst = arith.constant dense<0.000000e+00> : vector<8xf32>
    %4 = vector.multi_reduction <add>, %3, %cst [1] : vector<8x1000xf32> to vector<8xf32>
    %5 = vector.shape_cast %4 : vector<8xf32> to vector<8x1xf32>
    %c0_3 = arith.constant 0 : index
    %c0_4 = arith.constant 0 : index
    %6 = memref.load %arg3[%c0_3, %c0_4] : memref<1x1xf32, #tpu.memory_space<smem>>
    %7 = vector.broadcast %6 : f32 to vector<8x1xf32>
    %8 = arith.addf %5, %7 : vector<8x1xf32>
    %c0_5 = arith.constant 0 : index
    %c0_6 = arith.constant 0 : index
    %9 = vector.load %arg4[%c0_5, %c0_6] : memref<8x1xf32, #tpu.memory_space<vmem>>, vector<8x1xf32>
    tpu.vector_store %arg4[%c0_5, %c0_6], %8 {strides = array<i32>} : memref<8x1xf32, #tpu.memory_space<vmem>>, vector<8x1xf32>,
    return
  }
  func.func @transform_0(%arg0: i32) -> (i32, i32) {
    %c0_i32 = arith.constant 0 : i32
    %c0_i32_0 = arith.constant 0 : i32
    return %arg0, %c0_i32 : i32, i32
  }
  func.func @transform_1(%arg0: i32) -> (i32, i32) {
    %c0_i32 = arith.constant 0 : i32
    %c0_i32_0 = arith.constant 0 : i32
    %c0_i32_1 = arith.constant 0 : i32
    return %c0_i32, %c0_i32_0 : i32, i32
  }
  func.func @transform_2(%arg0: i32) -> (i32, i32) {
    %c0_i32 = arith.constant 0 : i32
    %c0_i32_0 = arith.constant 0 : i32
    %c0_i32_1 = arith.constant 0 : i32
    return %c0_i32, %c0_i32_0 : i32, i32
  }
  func.func @transform_3(%arg0: i32) -> (i32, i32) {
    %c0_i32 = arith.constant 0 : i32
    %c0_i32_0 = arith.constant 0 : i32
    return %arg0, %c0_i32 : i32, i32
  }
}

</mosaic_0001>

<llo_original>
// kernel: tpu_custom_call.1
$region0: #{tpu_custom_call.1}
  #allocation0 [shape = 'u32[]', space=smem, size = 0x4, offset = 0x4, fixed_abs, tag = 'smem constant byte address 0x4 - core index']
  #allocation1 [shape = 'u32[72,128]{1,0:T(1,128)}', space=vmem, size = 0x9000, scoped, tag = 'internal scratch']
  #allocation2 [shape = 'f32[1,1]{1,0:T(1,128)S(6)}', space=smem, size = 0x200, scoped, tag = 'scoped memory for tpu_custom_call.1']
  %s0 = inlined_call_operand.hbm [shape: f32[8,1000], index: 0, kind: input, shape index: {}]
  %s1 = inlined_call_operand.hbm [shape: f32[1,1000], index: 1, kind: input, shape index: {}]
  %s2 = inlined_call_operand.<no memory space> [shape: f32[1,1], index: 2, kind: input, shape index: {}]
  %s3 = inlined_call_operand.vmem [shape: f32[8,1], index: 3, kind: output, shape index: {}]
  %s4 = sld [smem:[#allocation0]]
  $region30: #{tpu_custom_call.1} parent=0
    _
  %s6 = ssub.s32 1, %s4
  %s7 = scalar_select 0, %s6, %s4
  %8 = sst [smem:[#allocation2]] %s2
  $region1: #{tpu_custom_call.1} parent=0
    #allocation3 [shape = 'u8[32768]{0}', space=vmem, size = 0x8000, scoped, tag = 'input window, operand 0, single buffered']
    #allocation4 [shape = 's32[1]{0}', space=sflag, size = 0x4, scoped, tag = 'scoped memory for tpu_custom_call.1']
    #allocation5 [shape = 'u8[4096]{0}', space=vmem, size = 0x1000, scoped, tag = 'input window, operand 1, single buffered']
    #allocation6 [shape = 's32[1]{0}', space=sflag, size = 0x4, scoped, tag = 'scoped memory for tpu_custom_call.1']
    %9 = vsyncpa [#allocation4], 0
    %10 = vsyncpa [#allocation6], 0
    // Predicated region
    $region2: #{tpu_custom_call.1} parent=1 // pred_check
      _
    $region3: #{tpu_custom_call.1} parent=1 // pred_check_branch
      %12 = sbr.rel (0) target = $region5
    $region4: #{tpu_custom_call.1} parent=1 // pred_region
      %14 = vsyncadd [#allocation4], 0
      %s16 = sshll.u32 %s0, 4
      %s17 = int_to_ptr.hbm [resolvable:$true] %s16
      %s18 = sshll.u32 [#allocation3], 4
      %s19 = int_to_ptr.vmem [resolvable:$true] %s18
      %21 = dma.hbm_to_vmem [thread:$0]  %s17, 1024, %s19, [#allocation4]
    $region5: #{tpu_custom_call.1} parent=1 // pred_fallthru
      _
    // Predicated region
    $region6: #{tpu_custom_call.1} parent=1 // pred_check
      _
    $region7: #{tpu_custom_call.1} parent=1 // pred_check_branch
      %23 = sbr.rel (0) target = $region9
    $region8: #{tpu_custom_call.1} parent=1 // pred_region
      %25 = vsyncadd [#allocation6], 0
      %s27 = sshll.u32 %s1, 4
      %s28 = int_to_ptr.hbm [resolvable:$true] %s27
      %s29 = sshll.u32 [#allocation5], 4
      %s30 = int_to_ptr.vmem [resolvable:$true] %s29
      %32 = dma.hbm_to_vmem [thread:$0]  %s28, 128, %s30, [#allocation6]
    $region9: #{tpu_custom_call.1} parent=1 // pred_fallthru
      _
    // Predicated region
    $region10: #{tpu_custom_call.1} parent=1 // pred_check
      _
    $region11: #{tpu_custom_call.1} parent=1 // pred_check_branch
      %34 = sbr.rel (0) target = $region13
    $region12: #{tpu_custom_call.1} parent=1 // pred_region
      _
    $region13: #{tpu_custom_call.1} parent=1 // pred_fallthru
      _
    // Predicated region
    $region14: #{tpu_custom_call.1} parent=1 // pred_check
      _
    $region15: #{tpu_custom_call.1} parent=1 // pred_check_branch
      %36 = sbr.rel (0) target = $region17
    $region16: #{tpu_custom_call.1} parent=1 // pred_region
      %38 = dma.done [#allocation4], 1024
    $region17: #{tpu_custom_call.1} parent=1 // pred_fallthru
      _
    // Predicated region
    $region18: #{tpu_custom_call.1} parent=1 // pred_check
      _
    $region19: #{tpu_custom_call.1} parent=1 // pred_check_branch
      %40 = sbr.rel (0) target = $region21
    $region20: #{tpu_custom_call.1} parent=1 // pred_region
      %42 = dma.done [#allocation6], 128
    $region21: #{tpu_custom_call.1} parent=1 // pred_fallthru
      _
    %v43 = vld [vmem:[#allocation3] sm:$0xff]
    %v44 = vld [vmem:[#allocation3 + $0x8] sm:$0xff]
    %v45 = vld [vmem:[#allocation3 + $0x10] sm:$0xff]
    %v46 = vld [vmem:[#allocation3 + $0x18] sm:$0xff]
    %v47 = vld [vmem:[#allocation3 + $0x20] sm:$0xff]
    %v48 = vld [vmem:[#allocation3 + $0x28] sm:$0xff]
    %v49 = vld [vmem:[#allocation3 + $0x30] sm:$0xff]
    %v50 = vld [vmem:[#allocation3 + $0x38] sm:$0xff]
    %v51 = vld [vmem:[#allocation5] sm:$0xff]
    %v53 = vperm.slane %v51, 0
    %v54 = vperm.slane %v51, 1
    %v55 = vperm.slane %v51, 2
    %v56 = vperm.slane %v51, 3
    %v57 = vperm.slane %v51, 4
    %v58 = vperm.slane %v51, 5
    %v59 = vperm.slane %v51, 6
    %v60 = vperm.slane %v51, 7
    %v69 = vmul.f32 %v43, %v53
    %v70 = vmul.f32 %v44, %v54
    %v71 = vmul.f32 %v45, %v55
    %v72 = vmul.f32 %v46, %v56
    %v73 = vmul.f32 %v47, %v57
    %v74 = vmul.f32 %v48, %v58
    %v75 = vmul.f32 %v49, %v59
    %v76 = vmul.f32 %v50, %v60
    %v77 = vadd.f32 %v69, %v70
    %v78 = vadd.f32 %v77, %v71
    %v79 = vadd.f32 %v78, %v72
    %v80 = vadd.f32 %v79, %v73
    %v81 = vadd.f32 %v80, %v74
    %v82 = vadd.f32 %v81, %v75
    %vm83 = vcmask 850944
    %v84 = vsel %vm83, %v76, 0.0
    %v85 = vadd.f32 %v82, %v84
    %86 = vadd.xlane.f32.xlu0 %v85
    %v87 = vpop.xlane.xlu0 %86
    %s88 = sld [smem:[#allocation2]]
    %v89 = vstv %s88
    %v90 = vadd.f32 %v87, %v89
    %vm91 = vcmask 7168
    %92 = vst.msk [vmem:[%s3] sm:$0xff] %vm91, %v90
    // Predicated region
    $region22: #{tpu_custom_call.1} parent=1 // pred_check
      _
    $region23: #{tpu_custom_call.1} parent=1 // pred_check_branch
      %94 = sbr.rel (0) target = $region25
    $region24: #{tpu_custom_call.1} parent=1 // pred_region
      _
    $region25: #{tpu_custom_call.1} parent=1 // pred_fallthru
      _
    // Predicated region
    $region26: #{tpu_custom_call.1} parent=1 // pred_check
      _
    $region27: #{tpu_custom_call.1} parent=1 // pred_check_branch
      %96 = sbr.rel (0) target = $region29
    $region28: #{tpu_custom_call.1} parent=1 // pred_region
      _
    $region29: #{tpu_custom_call.1} parent=1 // pred_fallthru
      _
    %97 = vsyncpa [#allocation4], 1
    %98 = vsyncpa [#allocation6], 1

</llo_original>
